<compile_context>
chip_gen: v5e
topology: v5e:2x2
jax: 0.10.0
libtpu: 0.0.40
codegen_flags: <defaults>
</compile_context>

<pallas_src>
import jax
import jax.numpy as jnp
from jax import lax
from jax.experimental import pallas as pl
from jax.experimental.pallas import tpu as pltpu


def rnn_classifier_kernel(x_ref, wih_ref, whh_ref, b_ref, wout_ref, bout_ref,
                          out_ref, xw_ref):
    """Single invocation: hoisted bf16 input projection + unrolled recurrence + head.

    x_ref   : (S*Bp, Ip) bf16  time-major, padded, flattened input
    wih_ref : (Ip, Hp)   bf16  W_ih^T (zero-padded)
    whh_ref : (Hp, Hp)   bf16  W_hh^T (zero-padded)
    b_ref   : (1, Hp)    f32   b_ih + b_hh (zero-padded)
    wout_ref: (Hp, Op)   bf16  W_out^T (zero-padded)
    bout_ref: (1, Op)    f32   b_out (padded columns = -1e30 so softmax ignores them)
    out_ref : (Bp, Op)   f32
    xw_ref  : (S*Bp, Hp) f32   VMEM scratch: hoisted X @ W_ih + bias
    """
    Bp = out_ref.shape[0]              # padded batch (sublane multiple)
    Hp = whh_ref.shape[0]
    S = xw_ref.shape[0] // Bp          # sequence length (static)
    f32, bf16 = jnp.float32, jnp.bfloat16

    # (1) Hoisted input projection for ALL time steps with the bias folded in:
    #     one big bf16 MXU matmul + one broadcast add, off the serial chain.
    xw_ref[...] = (jnp.dot(x_ref[...], wih_ref[...], preferred_element_type=f32)
                   + b_ref[...])

    # Only pin W_hh in vregs when it is small (Hp <= 128 bf16 -> 8 vregs);
    # otherwise read it from VMEM inside the dot to avoid spills across the unroll.
    hoist_whh = Hp <= 128
    whh_vregs = whh_ref[...] if hoist_whh else None

    # Independent 8-sublane batch chunks: their recurrences interleave inside each
    # unrolled step to hide MXU push->pop latency. nchunk divides Bp//8 so every
    # chunk stays sublane-tile aligned.
    nb = Bp // 8
    nchunk = next(d for d in (4, 3, 2, 1) if nb % d == 0)
    cb = Bp // nchunk

    def step(xw_t, hs):
        whh = whh_vregs if hoist_whh else whh_ref[...]
        new_hs = []
        for c in range(nchunk):
            xw_c = xw_t if nchunk == 1 else xw_t[c * cb:(c + 1) * cb, :]
            acc = jnp.dot(hs[c].astype(bf16), whh, preferred_element_type=f32)
            new_hs.append(jnp.maximum(xw_c + acc, 0.0))   # relu, f32
        return tuple(new_hs)

    h0 = tuple(jnp.zeros((cb, Hp), f32) for _ in range(nchunk))
    if S <= 32:
        # Static unroll: per-step slice offsets are compile-time constants.
        hs = h0
        for t in range(S):
            hs = step(xw_ref[t * Bp:(t + 1) * Bp, :], hs)
    else:
        # Bounded unroll for long sequences (IMEM / live-range pressure).
        # TODO(synk): for very large S also chunk xw over time (emit_pipeline) so
        # the scratch stays inside v7x's 64 MiB VMEM.
        def body(t, hs):
            off = pl.multiple_of(t * Bp, Bp)
            return step(xw_ref[pl.ds(off, Bp), :], hs)
        hs = lax.fori_loop(0, S, body, h0, unroll=8)

    h = hs[0] if nchunk == 1 else jnp.concatenate(hs, axis=0)

    # (3) Output head: Linear (bf16 MXU) + numerically stable softmax in f32.
    logits = (jnp.dot(h.astype(bf16), wout_ref[...], preferred_element_type=f32)
              + bout_ref[...])
    m = jnp.max(logits, axis=1, keepdims=True)
    e = jnp.exp(logits - m)
    denom = jnp.sum(e, axis=1, keepdims=True)
    r = pl.reciprocal(denom, approx=True)     # EUP slot
    r = r * (2.0 - denom * r)                 # one Newton step -> exact normalization
    out_ref[...] = (e * r).astype(out_ref.dtype)


def _round_up(x, m):
    return (x + m - 1) // m * m


def rnn_classifier_forward(x, w_ih, w_hh, b_ih, b_hh, w_out, b_out):
    """x: (B, S, I). Weights pre-transposed: (I,H), (H,H), (H,), (H,), (H,O), (O,)."""
    B, S, I = x.shape
    H = w_ih.shape[1]
    O = w_out.shape[1]

    f32, bf16 = jnp.float32, jnp.bfloat16

    # Batch -> sublanes, hidden/output -> 128 lanes. The input feature dim is only
    # padded to the bf16 sublane tile (16), NOT to 128: x is the only array that
    # scales with B*S, so this saves ~8x HBM bytes and projection FLOPs for small I.
    Bp = max(_round_up(B, 8), 8)
    Ip = max(_round_up(I, 16), 16)
    Hp = _round_up(H, 128)
    Op = _round_up(O, 128)

    # Time-major, padded, flattened bf16 input: row block [t*Bp:(t+1)*Bp] is time t.
    # TODO(synk): for large S, keep x as (B,S,I) in HBM and let a time-gridded
    # BlockSpec DMA the per-step slices instead of materializing this transpose.
    xt = jnp.transpose(x.astype(bf16), (1, 0, 2))            # (S, B, I)
    xt = jnp.pad(xt, ((0, 0), (0, Bp - B), (0, Ip - I)))     # (S, Bp, Ip)
    x2d = xt.reshape(S * Bp, Ip)

    wih_p = jnp.pad(w_ih.astype(bf16), ((0, Ip - I), (0, Hp - H)))
    whh_p = jnp.pad(w_hh.astype(bf16), ((0, Hp - H), (0, Hp - H)))
    b_p = jnp.pad((b_ih + b_hh).astype(f32), (0, Hp - H)).reshape(1, Hp)
    wout_p = jnp.pad(w_out.astype(bf16), ((0, Hp - H), (0, Op - O)))
    # Padded class columns get a huge negative f32 bias so softmax assigns them ~0.
    bout_p = jnp.pad(b_out.astype(f32), (0, Op - O),
                     constant_values=-1e30).reshape(1, Op)

    # Single invocation (no grid): everything is VMEM resident at these sizes, so
    # weights are single-buffered and there is no per-step pipeline overhead.
    # TODO(synk): on v7x, add a leading "parallel" batch grid axis (2 TensorCores)
    # and hold W_hh in the MXU across the recurrence via
    # pltpu.matmul_push_rhs / matmul_acc_lhs / matmul_pop (MRB).
    out_padded = pl.pallas_call(
        rnn_classifier_kernel,
        out_shape=jax.ShapeDtypeStruct((Bp, Op), f32),
        in_specs=[pl.BlockSpec(memory_space=pltpu.MemorySpace.VMEM)] * 6,
        out_specs=pl.BlockSpec(memory_space=pltpu.MemorySpace.VMEM),
        scratch_shapes=[pltpu.VMEM((S * Bp, Hp), f32)],   # hoisted X @ W_ih + bias
    )(x2d, wih_p, whh_p, b_p, wout_p, bout_p)

    return out_padded[:B, :O]


def reference_forward(x, w_ih, w_hh, b_ih, b_hh, w_out, b_out,
                      mxu_dtype=jnp.float32):
    """Pure-JAX reference matching torch.nn.RNN(relu) + Linear + Softmax(dim=1).

    mxu_dtype lets the reference mimic the kernel's bf16 MXU operands
    (f32 accumulation) for a tight comparison.
    """
    B, S, I = x.shape
    H = w_ih.shape[1]

    def mm(a, b):
        return jnp.dot(a.astype(mxu_dtype), b.astype(mxu_dtype),
                       preferred_element_type=jnp.float32)

    h = jnp.zeros((B, H), jnp.float32)
    for t in range(S):
        h = jnp.maximum(mm(x[:, t, :], w_ih) + b_ih + mm(h, w_hh) + b_hh, 0.0)
    logits = mm(h, w_out) + b_out
    return jax.nn.softmax(logits, axis=1)


if __name__ == "__main__":
    # Small shapes consistent with the module: (n_batch, seq_len, input_size).
    B, S, I, H, O = 2, 8, 16, 32, 8

    key = jax.random.PRNGKey(0)
    k = jax.random.split(key, 8)
    scale = 1.0 / jnp.sqrt(H)
    x = jax.random.normal(k[0], (B, S, I), jnp.float32)
    # Parameters stored pre-transposed for the x @ W convention.
    w_ih = jax.random.uniform(k[1], (I, H), jnp.float32, -scale, scale)
    w_hh = jax.random.uniform(k[2], (H, H), jnp.float32, -scale, scale)
    b_ih = jax.random.uniform(k[3], (H,), jnp.float32, -scale, scale)
    b_hh = jax.random.uniform(k[4], (H,), jnp.float32, -scale, scale)
    w_out = jax.random.uniform(k[5], (H, O), jnp.float32, -scale, scale)
    b_out = jax.random.uniform(k[6], (O,), jnp.float32, -scale, scale)

    out = rnn_classifier_forward(x, w_ih, w_hh, b_ih, b_hh, w_out, b_out)
    out = jax.block_until_ready(out)
    assert out.shape == (B, O)

    # Tight check vs a reference that mimics the kernel's bf16 MXU operands.
    ref_bf16 = reference_forward(x, w_ih, w_hh, b_ih, b_hh, w_out, b_out,
                                 mxu_dtype=jnp.bfloat16)
    assert jnp.allclose(out, ref_bf16, atol=2e-3, rtol=2e-3), \
        "mismatch vs bf16-MXU reference"
    # Loose sanity check vs the pure-f32 reference (covers bf16 operand rounding).
    ref_f32 = reference_forward(x, w_ih, w_hh, b_ih, b_hh, w_out, b_out)
    assert jnp.allclose(out, ref_f32, atol=5e-2, rtol=5e-2), \
        "mismatch vs f32 reference"
    # Newton-refined reciprocal => rows sum to 1 to f32 precision.
    assert jnp.allclose(jnp.sum(out, axis=1), 1.0, atol=1e-4), "rows must sum to 1"
    print("KERNEL_OK")
</pallas_src>

<mosaic_0001>
module attributes {stable_mosaic.version = 11 : i64} {
  func.func @rnn_classifier_kernel(%arg0: memref<64x16xbf16, #tpu.memory_space<vmem>>, %arg1: memref<16x128xbf16, #tpu.memory_space<vmem>>, %arg2: memref<128x128xbf16, #tpu.memory_space<vmem>>, %arg3: memref<1x128xf32, #tpu.memory_space<vmem>>, %arg4: memref<128x128xbf16, #tpu.memory_space<vmem>>, %arg5: memref<1x128xf32, #tpu.memory_space<vmem>>, %arg6: memref<8x128xf32, #tpu.memory_space<vmem>>, %arg7: memref<64x128xf32, #tpu.memory_space<vmem>>) attributes {dimension_semantics = [], scalar_prefetch = 0 : i64, scratch_operands = 1 : i64, tpu.core_type = #tpu.core_type<tc>} {
    %c0 = arith.constant 0 : index
    %c0_0 = arith.constant 0 : index
    %0 = vector.load %arg0[%c0, %c0_0] : memref<64x16xbf16, #tpu.memory_space<vmem>>, vector<64x16xbf16>
    %c0_1 = arith.constant 0 : index
    %c0_2 = arith.constant 0 : index
    %1 = vector.load %arg1[%c0_1, %c0_2] : memref<16x128xbf16, #tpu.memory_space<vmem>>, vector<16x128xbf16>
    %cst = arith.constant dense<0.000000e+00> : vector<64x128xf32>
    %2 = tpu.matmul %0, %1, %cst {dimension_numbers = #tpu.dot_dimension_numbers<[1], [0], [0], [1], [0, 0, 1, 1], [], []>} : vector<64x16xbf16>, vector<16x128xbf16>, vector<64x128xf32> -> vector<64x128xf32>
    %c0_3 = arith.constant 0 : index
    %c0_4 = arith.constant 0 : index
    %3 = vector.load %arg3[%c0_3, %c0_4] : memref<1x128xf32, #tpu.memory_space<vmem>>, vector<1x128xf32>
    %4 = vector.broadcast %3 : vector<1x128xf32> to vector<64x128xf32>
    %5 = arith.addf %2, %4 : vector<64x128xf32>
    %c0_5 = arith.constant 0 : index
    %c0_6 = arith.constant 0 : index
    %6 = vector.load %arg7[%c0_5, %c0_6] : memref<64x128xf32, #tpu.memory_space<vmem>>, vector<64x128xf32>
    tpu.vector_store %arg7[%c0_5, %c0_6], %5 {strides = array<i32>} : memref<64x128xf32, #tpu.memory_space<vmem>>, vector<64x128xf32>,
    %c0_7 = arith.constant 0 : index
    %c0_8 = arith.constant 0 : index
    %7 = vector.load %arg2[%c0_7, %c0_8] : memref<128x128xbf16, #tpu.memory_space<vmem>>, vector<128x128xbf16>
    %cst_9 = arith.constant 0.000000e+00 : f32
    %8 = vector.broadcast %cst_9 : f32 to vector<8x128xf32>
    %c0_10 = arith.constant 0 : index
    %c0_11 = arith.constant 0 : index
    %9 = vector.load %arg7[%c0_10, %c0_11] : memref<64x128xf32, #tpu.memory_space<vmem>>, vector<8x128xf32>
    %10 = arith.truncf %8 : vector<8x128xf32> to vector<8x128xbf16>
    %cst_12 = arith.constant dense<0.000000e+00> : vector<8x128xf32>
    %11 = tpu.matmul %10, %7, %cst_12 {dimension_numbers = #tpu.dot_dimension_numbers<[1], [0], [0], [1], [0, 0, 1, 1], [], []>} : vector<8x128xbf16>, vector<128x128xbf16>, vector<8x128xf32> -> vector<8x128xf32>
    %12 = arith.addf %9, %11 : vector<8x128xf32>
    %cst_13 = arith.constant 0.000000e+00 : f32
    %13 = vector.broadcast %cst_13 : f32 to vector<8x128xf32>
    %14 = arith.maximumf %12, %13 : vector<8x128xf32>
    %c8 = arith.constant 8 : index
    %c0_14 = arith.constant 0 : index
    %15 = vector.load %arg7[%c8, %c0_14] : memref<64x128xf32, #tpu.memory_space<vmem>>, vector<8x128xf32>
    %16 = arith.truncf %14 : vector<8x128xf32> to vector<8x128xbf16>
    %cst_15 = arith.constant dense<0.000000e+00> : vector<8x128xf32>
    %17 = tpu.matmul %16, %7, %cst_15 {dimension_numbers = #tpu.dot_dimension_numbers<[1], [0], [0], [1], [0, 0, 1, 1], [], []>} : vector<8x128xbf16>, vector<128x128xbf16>, vector<8x128xf32> -> vector<8x128xf32>
    %18 = arith.addf %15, %17 : vector<8x128xf32>
    %cst_16 = arith.constant 0.000000e+00 : f32
    %19 = vector.broadcast %cst_16 : f32 to vector<8x128xf32>
    %20 = arith.maximumf %18, %19 : vector<8x128xf32>
    %c16 = arith.constant 16 : index
    %c0_17 = arith.constant 0 : index
    %21 = vector.load %arg7[%c16, %c0_17] : memref<64x128xf32, #tpu.memory_space<vmem>>, vector<8x128xf32>
    %22 = arith.truncf %20 : vector<8x128xf32> to vector<8x128xbf16>
    %cst_18 = arith.constant dense<0.000000e+00> : vector<8x128xf32>
    %23 = tpu.matmul %22, %7, %cst_18 {dimension_numbers = #tpu.dot_dimension_numbers<[1], [0], [0], [1], [0, 0, 1, 1], [], []>} : vector<8x128xbf16>, vector<128x128xbf16>, vector<8x128xf32> -> vector<8x128xf32>
    %24 = arith.addf %21, %23 : vector<8x128xf32>
    %cst_19 = arith.constant 0.000000e+00 : f32
    %25 = vector.broadcast %cst_19 : f32 to vector<8x128xf32>
    %26 = arith.maximumf %24, %25 : vector<8x128xf32>
    %c24 = arith.constant 24 : index
    %c0_20 = arith.constant 0 : index
    %27 = vector.load %arg7[%c24, %c0_20] : memref<64x128xf32, #tpu.memory_space<vmem>>, vector<8x128xf32>
    %28 = arith.truncf %26 : vector<8x128xf32> to vector<8x128xbf16>
    %cst_21 = arith.constant dense<0.000000e+00> : vector<8x128xf32>
    %29 = tpu.matmul %28, %7, %cst_21 {dimension_numbers = #tpu.dot_dimension_numbers<[1], [0], [0], [1], [0, 0, 1, 1], [], []>} : vector<8x128xbf16>, vector<128x128xbf16>, vector<8x128xf32> -> vector<8x128xf32>
    %30 = arith.addf %27, %29 : vector<8x128xf32>
    %cst_22 = arith.constant 0.000000e+00 : f32
    %31 = vector.broadcast %cst_22 : f32 to vector<8x128xf32>
    %32 = arith.maximumf %30, %31 : vector<8x128xf32>
    %c32 = arith.constant 32 : index
    %c0_23 = arith.constant 0 : index
    %33 = vector.load %arg7[%c32, %c0_23] : memref<64x128xf32, #tpu.memory_space<vmem>>, vector<8x128xf32>
    %34 = arith.truncf %32 : vector<8x128xf32> to vector<8x128xbf16>
    %cst_24 = arith.constant dense<0.000000e+00> : vector<8x128xf32>
    %35 = tpu.matmul %34, %7, %cst_24 {dimension_numbers = #tpu.dot_dimension_numbers<[1], [0], [0], [1], [0, 0, 1, 1], [], []>} : vector<8x128xbf16>, vector<128x128xbf16>, vector<8x128xf32> -> vector<8x128xf32>
    %36 = arith.addf %33, %35 : vector<8x128xf32>
    %cst_25 = arith.constant 0.000000e+00 : f32
    %37 = vector.broadcast %cst_25 : f32 to vector<8x128xf32>
    %38 = arith.maximumf %36, %37 : vector<8x128xf32>
    %c40 = arith.constant 40 : index
    %c0_26 = arith.constant 0 : index
    %39 = vector.load %arg7[%c40, %c0_26] : memref<64x128xf32, #tpu.memory_space<vmem>>, vector<8x128xf32>
    %40 = arith.truncf %38 : vector<8x128xf32> to vector<8x128xbf16>
    %cst_27 = arith.constant dense<0.000000e+00> : vector<8x128xf32>
    %41 = tpu.matmul %40, %7, %cst_27 {dimension_numbers = #tpu.dot_dimension_numbers<[1], [0], [0], [1], [0, 0, 1, 1], [], []>} : vector<8x128xbf16>, vector<128x128xbf16>, vector<8x128xf32> -> vector<8x128xf32>
    %42 = arith.addf %39, %41 : vector<8x128xf32>
    %cst_28 = arith.constant 0.000000e+00 : f32
    %43 = vector.broadcast %cst_28 : f32 to vector<8x128xf32>
    %44 = arith.maximumf %42, %43 : vector<8x128xf32>
    %c48 = arith.constant 48 : index
    %c0_29 = arith.constant 0 : index
    %45 = vector.load %arg7[%c48, %c0_29] : memref<64x128xf32, #tpu.memory_space<vmem>>, vector<8x128xf32>
    %46 = arith.truncf %44 : vector<8x128xf32> to vector<8x128xbf16>
    %cst_30 = arith.constant dense<0.000000e+00> : vector<8x128xf32>
    %47 = tpu.matmul %46, %7, %cst_30 {dimension_numbers = #tpu.dot_dimension_numbers<[1], [0], [0], [1], [0, 0, 1, 1], [], []>} : vector<8x128xbf16>, vector<128x128xbf16>, vector<8x128xf32> -> vector<8x128xf32>
    %48 = arith.addf %45, %47 : vector<8x128xf32>
    %cst_31 = arith.constant 0.000000e+00 : f32
    %49 = vector.broadcast %cst_31 : f32 to vector<8x128xf32>
    %50 = arith.maximumf %48, %49 : vector<8x128xf32>
    %c56 = arith.constant 56 : index
    %c0_32 = arith.constant 0 : index
    %51 = vector.load %arg7[%c56, %c0_32] : memref<64x128xf32, #tpu.memory_space<vmem>>, vector<8x128xf32>
    %52 = arith.truncf %50 : vector<8x128xf32> to vector<8x128xbf16>
    %cst_33 = arith.constant dense<0.000000e+00> : vector<8x128xf32>
    %53 = tpu.matmul %52, %7, %cst_33 {dimension_numbers = #tpu.dot_dimension_numbers<[1], [0], [0], [1], [0, 0, 1, 1], [], []>} : vector<8x128xbf16>, vector<128x128xbf16>, vector<8x128xf32> -> vector<8x128xf32>
    %54 = arith.addf %51, %53 : vector<8x128xf32>
    %cst_34 = arith.constant 0.000000e+00 : f32
    %55 = vector.broadcast %cst_34 : f32 to vector<8x128xf32>
    %56 = arith.maximumf %54, %55 : vector<8x128xf32>
    %57 = arith.truncf %56 : vector<8x128xf32> to vector<8x128xbf16>
    %c0_35 = arith.constant 0 : index
    %c0_36 = arith.constant 0 : index
    %58 = vector.load %arg4[%c0_35, %c0_36] : memref<128x128xbf16, #tpu.memory_space<vmem>>, vector<128x128xbf16>
    %cst_37 = arith.constant dense<0.000000e+00> : vector<8x128xf32>
    %59 = tpu.matmul %57, %58, %cst_37 {dimension_numbers = #tpu.dot_dimension_numbers<[1], [0], [0], [1], [0, 0, 1, 1], [], []>} : vector<8x128xbf16>, vector<128x128xbf16>, vector<8x128xf32> -> vector<8x128xf32>
    %c0_38 = arith.constant 0 : index
    %c0_39 = arith.constant 0 : index
    %60 = vector.load %arg5[%c0_38, %c0_39] : memref<1x128xf32, #tpu.memory_space<vmem>>, vector<1x128xf32>
    %61 = vector.broadcast %60 : vector<1x128xf32> to vector<8x128xf32>
    %62 = arith.addf %59, %61 : vector<8x128xf32>
    %cst_40 = arith.constant dense<0xFF800000> : vector<8xf32>
    %63 = vector.multi_reduction <maximumf>, %62, %cst_40 [1] : vector<8x128xf32> to vector<8xf32>
    %64 = vector.shape_cast %63 : vector<8xf32> to vector<8x1xf32>
    %65 = vector.broadcast %64 : vector<8x1xf32> to vector<8x128xf32>
    %66 = arith.subf %62, %65 : vector<8x128xf32>
    %67 = math.exp %66 : vector<8x128xf32>
    %cst_41 = arith.constant dense<0.000000e+00> : vector<8xf32>
    %68 = vector.multi_reduction <add>, %67, %cst_41 [1] : vector<8x128xf32> to vector<8xf32>
    %69 = vector.shape_cast %68 : vector<8xf32> to vector<8x1xf32>
    %70 = tpu.reciprocal %69 {approx = true} : vector<8x1xf32> -> vector<8x1xf32>
    %71 = arith.mulf %69, %70 : vector<8x1xf32>
    %cst_42 = arith.constant 2.000000e+00 : f32
    %72 = vector.broadcast %cst_42 : f32 to vector<8x1xf32>
    %73 = arith.subf %72, %71 : vector<8x1xf32>
    %74 = arith.mulf %70, %73 : vector<8x1xf32>
    %75 = vector.broadcast %74 : vector<8x1xf32> to vector<8x128xf32>
    %76 = arith.mulf %67, %75 : vector<8x128xf32>
    %c0_43 = arith.constant 0 : index
    %c0_44 = arith.constant 0 : index
    %77 = vector.load %arg6[%c0_43, %c0_44] : memref<8x128xf32, #tpu.memory_space<vmem>>, vector<8x128xf32>
    tpu.vector_store %arg6[%c0_43, %c0_44], %76 {strides = array<i32>} : memref<8x128xf32, #tpu.memory_space<vmem>>, vector<8x128xf32>,
    return
  }
}

</mosaic_0001>

<llo_original>
// kernel: tpu_custom_call.1
$region0: #{tpu_custom_call.1}
  #allocation0 [shape = 'u32[]', space=smem, size = 0x4, offset = 0x4, fixed_abs, tag = 'smem constant byte address 0x4 - core index']
  #allocation1 [shape = 'u32[72,128]{1,0:T(1,128)}', space=vmem, size = 0x9000, scoped, tag = 'internal scratch']
  #allocation2 [shape = 'f32[64,128]{1,0:T(8,128)}', space=vmem, size = 0x8000, scoped, tag = 'scratch operand']
  %s0 = inlined_call_operand.vmem [shape: bf16[64,16], index: 0, kind: input, shape index: {}]
  %s1 = inlined_call_operand.vmem [shape: bf16[16,128], index: 1, kind: input, shape index: {}]
  %s2 = inlined_call_operand.hbm [shape: bf16[128,128], index: 2, kind: input, shape index: {}]
  %s3 = inlined_call_operand.vmem [shape: f32[1,128], index: 3, kind: input, shape index: {}]
  %s4 = inlined_call_operand.hbm [shape: bf16[128,128], index: 4, kind: input, shape index: {}]
  %s5 = inlined_call_operand.vmem [shape: f32[1,128], index: 5, kind: input, shape index: {}]
  %s6 = inlined_call_operand.hbm [shape: f32[8,128], index: 6, kind: output, shape index: {}]
  %s7 = sld [smem:[#allocation0]]
  $region42: #{tpu_custom_call.1} parent=0
    _
  %s9 = ssub.s32 1, %s7
  %s10 = scalar_select 0, %s9, %s7
  $region1: #{tpu_custom_call.1} parent=0
    #allocation3 [shape = 'u8[32768]{0}', space=vmem, size = 0x8000, scoped, tag = 'input window, operand 2, single buffered']
    #allocation4 [shape = 's32[1]{0}', space=sflag, size = 0x4, scoped, tag = 'scoped memory for tpu_custom_call.1']
    #allocation5 [shape = 's32[1]{0}', space=sflag, size = 0x4, scoped, tag = 'scoped memory for tpu_custom_call.1']
    #allocation6 [shape = 'u8[32768]{0}', space=vmem, size = 0x8000, scoped, tag = 'input window, operand 4, single buffered']
    #allocation7 [shape = 's32[1]{0}', space=sflag, size = 0x4, scoped, tag = 'scoped memory for tpu_custom_call.1']
    #allocation8 [shape = 'u8[4096]{0}', space=vmem, size = 0x1000, scoped, tag = 'output window, operand 0, single buffered']
    %11 = vsyncpa [#allocation4], 0
    %12 = vsyncpa [#allocation7], 0
    %13 = vsyncpa [#allocation5], 0
    // Predicated region
    $region2: #{tpu_custom_call.1} parent=1 // pred_check
      _
    $region3: #{tpu_custom_call.1} parent=1 // pred_check_branch
      %15 = sbr.rel (0) target = $region5
    $region4: #{tpu_custom_call.1} parent=1 // pred_region
      _
    $region5: #{tpu_custom_call.1} parent=1 // pred_fallthru
      _
    // Predicated region
    $region6: #{tpu_custom_call.1} parent=1 // pred_check
      _
    $region7: #{tpu_custom_call.1} parent=1 // pred_check_branch
      %17 = sbr.rel (0) target = $region9
    $region8: #{tpu_custom_call.1} parent=1 // pred_region
      _
    $region9: #{tpu_custom_call.1} parent=1 // pred_fallthru
      _
    // Predicated region
    $region10: #{tpu_custom_call.1} parent=1 // pred_check
      _
    $region11: #{tpu_custom_call.1} parent=1 // pred_check_branch
      %19 = sbr.rel (0) target = $region13
    $region12: #{tpu_custom_call.1} parent=1 // pred_region
      %21 = vsyncadd [#allocation4], 0
      %s22 = sshll.u32 %s2, 4
      %s23 = int_to_ptr.hbm [resolvable:$true] %s22
      %s24 = sshll.u32 [#allocation3], 4
      %s25 = int_to_ptr.vmem [resolvable:$true] %s24
      %30 = dma.hbm_to_vmem [thread:$0]  %s23, 1024, %s25, [#allocation4], 64, 64, 4
    $region13: #{tpu_custom_call.1} parent=1 // pred_fallthru
      _
    // Predicated region
    $region14: #{tpu_custom_call.1} parent=1 // pred_check
      _
    $region15: #{tpu_custom_call.1} parent=1 // pred_check_branch
      %32 = sbr.rel (0) target = $region17
    $region16: #{tpu_custom_call.1} parent=1 // pred_region
      _
    $region17: #{tpu_custom_call.1} parent=1 // pred_fallthru
      _
    // Predicated region
    $region18: #{tpu_custom_call.1} parent=1 // pred_check
      _
    $region19: #{tpu_custom_call.1} parent=1 // pred_check_branch
      %34 = sbr.rel (0) target = $region21
    $region20: #{tpu_custom_call.1} parent=1 // pred_region
      %36 = vsyncadd [#allocation7], 0
      %s37 = sshll.u32 %s4, 4
      %s38 = int_to_ptr.hbm [resolvable:$true] %s37
      %s39 = sshll.u32 [#allocation6], 4
      %s40 = int_to_ptr.vmem [resolvable:$true] %s39
      %45 = dma.hbm_to_vmem [thread:$0]  %s38, 1024, %s40, [#allocation7], 64, 64, 4
    $region21: #{tpu_custom_call.1} parent=1 // pred_fallthru
      _
    // Predicated region
    $region22: #{tpu_custom_call.1} parent=1 // pred_check
      _
    $region23: #{tpu_custom_call.1} parent=1 // pred_check_branch
      %47 = sbr.rel (0) target = $region25
    $region24: #{tpu_custom_call.1} parent=1 // pred_region
      _
    $region25: #{tpu_custom_call.1} parent=1 // pred_fallthru
      _
    // Predicated region
    $region26: #{tpu_custom_call.1} parent=1 // pred_check
      _
    $region27: #{tpu_custom_call.1} parent=1 // pred_check_branch
      %49 = sbr.rel (0) target = $region29
    $region28: #{tpu_custom_call.1} parent=1 // pred_region
      %51 = dma.done [#allocation4], 1024
    $region29: #{tpu_custom_call.1} parent=1 // pred_fallthru
      _
    // Predicated region
    $region30: #{tpu_custom_call.1} parent=1 // pred_check
      _
    $region31: #{tpu_custom_call.1} parent=1 // pred_check_branch
      %53 = sbr.rel (0) target = $region33
    $region32: #{tpu_custom_call.1} parent=1 // pred_region
      %55 = dma.done [#allocation7], 1024
    $region33: #{tpu_custom_call.1} parent=1 // pred_fallthru
      _
    %v57 = vld [vmem:[%s0] sm:$0xf]
    %v58 = vld [vmem:[%s0 + $0x4] sm:$0xf]
    %v59 = vld [vmem:[%s0 + $0x8] sm:$0xf]
    %v60 = vld [vmem:[%s0 + $0xc] sm:$0xf]
    %v61 = vld [vmem:[%s0 + $0x10] sm:$0xf]
    %v62 = vld [vmem:[%s0 + $0x14] sm:$0xf]
    %v63 = vld [vmem:[%s0 + $0x18] sm:$0xf]
    %v64 = vld [vmem:[%s0 + $0x1c] sm:$0xf]
    %v65 = vld [vmem:[%s1] sm:$0xf]
    %v66 = vld [vmem:[%s1 + $0x4] sm:$0xf]
    %v67 = vld [vmem:[%s3] sm:$0x1]
    %v69 = vperm.slane %v67, 0
    %v79 = vunpack.c.l.b16 %v57
    %v80 = vunpack.c.l.b16 %v58
    %v81 = vunpack.c.l.b16 %v59
    %v82 = vunpack.c.l.b16 %v60
    %v83 = vunpack.c.l.b16 %v61
    %v84 = vunpack.c.l.b16 %v62
    %v85 = vunpack.c.l.b16 %v63
    %v86 = vunpack.c.l.b16 %v64
    %v87 = vpack.c.b16 %v80, %v79
    %v88 = vpack.c.b16 %v82, %v81
    %v89 = vpack.c.b16 %v84, %v83
    %v90 = vpack.c.b16 %v86, %v85
    %v93 = vunpack.c.l.b16 %v65
    %v94 = vunpack.c.l.b16 %v66
    %v95 = vpack.c.b16 %v94, %v93
    %vm97 = vcmask 130048
    %v99 = vsel %vm97, %v87, 0
    %v102 = vsel %vm97, %v88, 0
    %v105 = vsel %vm97, %v89, 0
    %v108 = vsel %vm97, %v90, 0
    %110 = vmatpush.bf16.msra.mxu0 0
    %111 = vmatpush.bf16.msra.mxu0 0
    %112 = vmatpush.bf16.msra.mxu0 0
    %113 = vmatpush.bf16.msra.mxu0 0
    %114 = vmatpush.bf16.msra.mxu0 0
    %115 = vmatpush.bf16.msra.mxu0 0
    %116 = vmatpush.bf16.msra.mxu0 0
    %117 = vmatpush.bf16.msra.mxu0 %v95
    %118 = vmatmul.bf16.gmra.mxu0 %v99
    %v119 = vpop.f32.mrf.mxu0
    %v120 = vadd.f32 %v69, %v119
    %v121 = vpop.f32.mrf.mxu0
    %v122 = vadd.f32 %v69, %v121
    %123 = vmatmul.bf16.gmra.mxu0 %v102
    %v124 = vpop.f32.mrf.mxu0
    %v125 = vadd.f32 %v69, %v124
    %v126 = vpop.f32.mrf.mxu0
    %v127 = vadd.f32 %v69, %v126
    %128 = vmatmul.bf16.gmra.mxu0 %v105
    %v129 = vpop.f32.mrf.mxu0
    %v130 = vadd.f32 %v69, %v129
    %v131 = vpop.f32.mrf.mxu0
    %v132 = vadd.f32 %v69, %v131
    %133 = vmatmul.bf16.gmra.mxu0 %v108
    %v134 = vpop.f32.mrf.mxu0
    %v135 = vadd.f32 %v69, %v134
    %v136 = vpop.f32.mrf.mxu0
    %v137 = vadd.f32 %v69, %v136
    %138 = vdwg.mxu0
    %139 = vst [vmem:[#allocation2] sm:$0xff] %v120
    %140 = vst [vmem:[#allocation2 + $0x8] sm:$0xff] %v122
    %141 = vst [vmem:[#allocation2 + $0x10] sm:$0xff] %v125
    %142 = vst [vmem:[#allocation2 + $0x18] sm:$0xff] %v127
    %143 = vst [vmem:[#allocation2 + $0x20] sm:$0xff] %v130
    %144 = vst [vmem:[#allocation2 + $0x28] sm:$0xff] %v132
    %145 = vst [vmem:[#allocation2 + $0x30] sm:$0xff] %v135
    %146 = vst [vmem:[#allocation2 + $0x38] sm:$0xff] %v137
    %v147 = vld [vmem:[#allocation3] sm:$0xf]
    %v148 = vld [vmem:[#allocation3 + $0x4] sm:$0xf]
    %v149 = vld [vmem:[#allocation3 + $0x8] sm:$0xf]
    %v150 = vld [vmem:[#allocation3 + $0xc] sm:$0xf]
    %v151 = vld [vmem:[#allocation3 + $0x10] sm:$0xf]
    %v152 = vld [vmem:[#allocation3 + $0x14] sm:$0xf]
    %v153 = vld [vmem:[#allocation3 + $0x18] sm:$0xf]
    %v154 = vld [vmem:[#allocation3 + $0x1c] sm:$0xf]
    %v155 = vld [vmem:[#allocation3 + $0x20] sm:$0xf]
    %v156 = vld [vmem:[#allocation3 + $0x24] sm:$0xf]
    %v157 = vld [vmem:[#allocation3 + $0x28] sm:$0xf]
    %v158 = vld [vmem:[#allocation3 + $0x2c] sm:$0xf]
    %v159 = vld [vmem:[#allocation3 + $0x30] sm:$0xf]
    %v160 = vld [vmem:[#allocation3 + $0x34] sm:$0xf]
    %v161 = vld [vmem:[#allocation3 + $0x38] sm:$0xf]
    %v162 = vld [vmem:[#allocation3 + $0x3c] sm:$0xf]
    %v163 = vld [vmem:[#allocation2] sm:$0xff]
    %v180 = vunpack.c.l.b16 %v147
    %v181 = vunpack.c.l.b16 %v148
    %v182 = vunpack.c.l.b16 %v149
    %v183 = vunpack.c.l.b16 %v150
    %v184 = vunpack.c.l.b16 %v151
    %v185 = vunpack.c.l.b16 %v152
    %v186 = vunpack.c.l.b16 %v153
    %v187 = vunpack.c.l.b16 %v154
    %v188 = vunpack.c.l.b16 %v155
    %v189 = vunpack.c.l.b16 %v156
    %v190 = vunpack.c.l.b16 %v157
    %v191 = vunpack.c.l.b16 %v158
    %v192 = vunpack.c.l.b16 %v159
    %v193 = vunpack.c.l.b16 %v160
    %v194 = vunpack.c.l.b16 %v161
    %v195 = vunpack.c.l.b16 %v162
    %v196 = vpack.c.b16 %v181, %v180
    %v197 = vpack.c.b16 %v183, %v182
    %v198 = vpack.c.b16 %v185, %v184
    %v199 = vpack.c.b16 %v187, %v186
    %v200 = vpack.c.b16 %v189, %v188
    %v201 = vpack.c.b16 %v191, %v190
    %v202 = vpack.c.b16 %v193, %v192
    %v203 = vpack.c.b16 %v195, %v194
    %212 = vmatpush.bf16.msra.mxu0 %v203
    %213 = vmatpush.bf16.msra.mxu0 %v202
    %214 = vmatpush.bf16.msra.mxu0 %v201
    %215 = vmatpush.bf16.msra.mxu0 %v200
    %216 = vmatpush.bf16.msra.mxu0 %v199
    %217 = vmatpush.bf16.msra.mxu0 %v198
    %218 = vmatpush.bf16.msra.mxu0 %v197
    %219 = vmatpush.bf16.msra.mxu0 %v196
    %220 = vmatmul.bf16.gmra.mxu0 0
    %v221 = vpop.f32.mrf.mxu0
    %v222 = vadd.f32 0.0, %v221
    %v223 = vpop.f32.mrf.mxu0
    %224 = vdwg.mxu0
    %v225 = vadd.f32 %v163, %v222
    %v226 = vmax.f32 %v225, 0.0
    %v227 = vld [vmem:[#allocation2 + $0x8] sm:$0xff]
    %v228 = vpack.c.bf16 %v226, %v226
    %229 = vmatpush.bf16.msra.mxu0 %v203
    %230 = vmatpush.bf16.msra.mxu0 %v202
    %231 = vmatpush.bf16.msra.mxu0 %v201
    %232 = vmatpush.bf16.msra.mxu0 %v200
    %233 = vmatpush.bf16.msra.mxu0 %v199
    %234 = vmatpush.bf16.msra.mxu0 %v198
    %235 = vmatpush.bf16.msra.mxu0 %v197
    %236 = vmatpush.bf16.msra.mxu0 %v196
    %237 = vmatmul.bf16.gmra.mxu0 %v228
    %v238 = vpop.f32.mrf.mxu0
    %v239 = vadd.f32 0.0, %v238
    %v240 = vpop.f32.mrf.mxu0
    %241 = vdwg.mxu0
    %v242 = vadd.f32 %v227, %v239
    %v243 = vmax.f32 %v242, 0.0
    %v244 = vld [vmem:[#allocation2 + $0x10] sm:$0xff]
    %v245 = vpack.c.bf16 %v243, %v243
    %246 = vmatpush.bf16.msra.mxu0 %v203
    %247 = vmatpush.bf16.msra.mxu0 %v202
    %248 = vmatpush.bf16.msra.mxu0 %v201
    %249 = vmatpush.bf16.msra.mxu0 %v200
    %250 = vmatpush.bf16.msra.mxu0 %v199
    %251 = vmatpush.bf16.msra.mxu0 %v198
    %252 = vmatpush.bf16.msra.mxu0 %v197
    %253 = vmatpush.bf16.msra.mxu0 %v196
    %254 = vmatmul.bf16.gmra.mxu0 %v245
    %v255 = vpop.f32.mrf.mxu0
    %v256 = vadd.f32 0.0, %v255
    %v257 = vpop.f32.mrf.mxu0
    %258 = vdwg.mxu0
    %v259 = vadd.f32 %v244, %v256
    %v260 = vmax.f32 %v259, 0.0
    %v261 = vld [vmem:[#allocation2 + $0x18] sm:$0xff]
    %v262 = vpack.c.bf16 %v260, %v260
    %263 = vmatpush.bf16.msra.mxu0 %v203
    %264 = vmatpush.bf16.msra.mxu0 %v202
    %265 = vmatpush.bf16.msra.mxu0 %v201
    %266 = vmatpush.bf16.msra.mxu0 %v200
    %267 = vmatpush.bf16.msra.mxu0 %v199
    %268 = vmatpush.bf16.msra.mxu0 %v198
    %269 = vmatpush.bf16.msra.mxu0 %v197
    %270 = vmatpush.bf16.msra.mxu0 %v196
    %271 = vmatmul.bf16.gmra.mxu0 %v262
    %v272 = vpop.f32.mrf.mxu0
    %v273 = vadd.f32 0.0, %v272
    %v274 = vpop.f32.mrf.mxu0
    %275 = vdwg.mxu0
    %v276 = vadd.f32 %v261, %v273
    %v277 = vmax.f32 %v276, 0.0
    %v278 = vld [vmem:[#allocation2 + $0x20] sm:$0xff]
    %v279 = vpack.c.bf16 %v277, %v277
    %280 = vmatpush.bf16.msra.mxu0 %v203
    %281 = vmatpush.bf16.msra.mxu0 %v202
    %282 = vmatpush.bf16.msra.mxu0 %v201
    %283 = vmatpush.bf16.msra.mxu0 %v200
    %284 = vmatpush.bf16.msra.mxu0 %v199
    %285 = vmatpush.bf16.msra.mxu0 %v198
    %286 = vmatpush.bf16.msra.mxu0 %v197
    %287 = vmatpush.bf16.msra.mxu0 %v196
    %288 = vmatmul.bf16.gmra.mxu0 %v279
    %v289 = vpop.f32.mrf.mxu0
    %v290 = vadd.f32 0.0, %v289
    %v291 = vpop.f32.mrf.mxu0
    %292 = vdwg.mxu0
    %v293 = vadd.f32 %v278, %v290
    %v294 = vmax.f32 %v293, 0.0
    %v295 = vld [vmem:[#allocation2 + $0x28] sm:$0xff]
    %v296 = vpack.c.bf16 %v294, %v294
    %297 = vmatpush.bf16.msra.mxu0 %v203
    %298 = vmatpush.bf16.msra.mxu0 %v202
    %299 = vmatpush.bf16.msra.mxu0 %v201
    %300 = vmatpush.bf16.msra.mxu0 %v200
    %301 = vmatpush.bf16.msra.mxu0 %v199
    %302 = vmatpush.bf16.msra.mxu0 %v198
    %303 = vmatpush.bf16.msra.mxu0 %v197
    %304 = vmatpush.bf16.msra.mxu0 %v196
    %305 = vmatmul.bf16.gmra.mxu0 %v296
    %v306 = vpop.f32.mrf.mxu0
    %v307 = vadd.f32 0.0, %v306
    %v308 = vpop.f32.mrf.mxu0
    %309 = vdwg.mxu0
    %v310 = vadd.f32 %v295, %v307
    %v311 = vmax.f32 %v310, 0.0
    %v312 = vld [vmem:[#allocation2 + $0x30] sm:$0xff]
    %v313 = vpack.c.bf16 %v311, %v311
    %314 = vmatpush.bf16.msra.mxu0 %v203
    %315 = vmatpush.bf16.msra.mxu0 %v202
    %316 = vmatpush.bf16.msra.mxu0 %v201
    %317 = vmatpush.bf16.msra.mxu0 %v200
    %318 = vmatpush.bf16.msra.mxu0 %v199
    %319 = vmatpush.bf16.msra.mxu0 %v198
    %320 = vmatpush.bf16.msra.mxu0 %v197
    %321 = vmatpush.bf16.msra.mxu0 %v196
    %322 = vmatmul.bf16.gmra.mxu0 %v313
    %v323 = vpop.f32.mrf.mxu0
    %v324 = vadd.f32 0.0, %v323
    %v325 = vpop.f32.mrf.mxu0
    %326 = vdwg.mxu0
    %v327 = vadd.f32 %v312, %v324
    %v328 = vmax.f32 %v327, 0.0
    %v329 = vld [vmem:[#allocation2 + $0x38] sm:$0xff]
    %v330 = vpack.c.bf16 %v328, %v328
    %331 = vmatpush.bf16.msra.mxu0 %v203
    %332 = vmatpush.bf16.msra.mxu0 %v202
    %333 = vmatpush.bf16.msra.mxu0 %v201
    %334 = vmatpush.bf16.msra.mxu0 %v200
    %335 = vmatpush.bf16.msra.mxu0 %v199
    %336 = vmatpush.bf16.msra.mxu0 %v198
    %337 = vmatpush.bf16.msra.mxu0 %v197
    %338 = vmatpush.bf16.msra.mxu0 %v196
    %339 = vmatmul.bf16.gmra.mxu0 %v330
    %v340 = vpop.f32.mrf.mxu0
    %v341 = vadd.f32 0.0, %v340
    %v342 = vpop.f32.mrf.mxu0
    %343 = vdwg.mxu0
    %v344 = vadd.f32 %v329, %v341
    %v345 = vmax.f32 %v344, 0.0
    %v346 = vpack.c.bf16 %v345, %v345
    %v347 = vld [vmem:[#allocation6] sm:$0xf]
    %v348 = vld [vmem:[#allocation6 + $0x4] sm:$0xf]
    %v349 = vld [vmem:[#allocation6 + $0x8] sm:$0xf]
    %v350 = vld [vmem:[#allocation6 + $0xc] sm:$0xf]
    %v351 = vld [vmem:[#allocation6 + $0x10] sm:$0xf]
    %v352 = vld [vmem:[#allocation6 + $0x14] sm:$0xf]
    %v353 = vld [vmem:[#allocation6 + $0x18] sm:$0xf]
    %v354 = vld [vmem:[#allocation6 + $0x1c] sm:$0xf]
    %v355 = vld [vmem:[#allocation6 + $0x20] sm:$0xf]
    %v356 = vld [vmem:[#allocation6 + $0x24] sm:$0xf]
    %v357 = vld [vmem:[#allocation6 + $0x28] sm:$0xf]
    %v358 = vld [vmem:[#allocation6 + $0x2c] sm:$0xf]
    %v359 = vld [vmem:[#allocation6 + $0x30] sm:$0xf]
    %v360 = vld [vmem:[#allocation6 + $0x34] sm:$0xf]
    %v361 = vld [vmem:[#allocation6 + $0x38] sm:$0xf]
    %v362 = vld [vmem:[#allocation6 + $0x3c] sm:$0xf]
    %v363 = vld [vmem:[%s5] sm:$0x1]
    %v365 = vperm.slane %v363, 0
    %v383 = vunpack.c.l.b16 %v347
    %v384 = vunpack.c.l.b16 %v348
    %v385 = vunpack.c.l.b16 %v349
    %v386 = vunpack.c.l.b16 %v350
    %v387 = vunpack.c.l.b16 %v351
    %v388 = vunpack.c.l.b16 %v352
    %v389 = vunpack.c.l.b16 %v353
    %v390 = vunpack.c.l.b16 %v354
    %v391 = vunpack.c.l.b16 %v355
    %v392 = vunpack.c.l.b16 %v356
    %v393 = vunpack.c.l.b16 %v357
    %v394 = vunpack.c.l.b16 %v358
    %v395 = vunpack.c.l.b16 %v359
    %v396 = vunpack.c.l.b16 %v360
    %v397 = vunpack.c.l.b16 %v361
    %v398 = vunpack.c.l.b16 %v362
    %v399 = vpack.c.b16 %v384, %v383
    %v400 = vpack.c.b16 %v386, %v385
    %v401 = vpack.c.b16 %v388, %v387
    %v402 = vpack.c.b16 %v390, %v389
    %v403 = vpack.c.b16 %v392, %v391
    %v404 = vpack.c.b16 %v394, %v393
    %v405 = vpack.c.b16 %v396, %v395
    %v406 = vpack.c.b16 %v398, %v397
    %415 = vmatpush.bf16.msra.mxu0 %v406
    %416 = vmatpush.bf16.msra.mxu0 %v405
    %417 = vmatpush.bf16.msra.mxu0 %v404
    %418 = vmatpush.bf16.msra.mxu0 %v403
    %419 = vmatpush.bf16.msra.mxu0 %v402
    %420 = vmatpush.bf16.msra.mxu0 %v401
    %421 = vmatpush.bf16.msra.mxu0 %v400
    %422 = vmatpush.bf16.msra.mxu0 %v399
    %423 = vmatmul.bf16.gmra.mxu0 %v346
    %v424 = vpop.f32.mrf.mxu0
    %v425 = vadd.f32 %v365, %v424
    %v426 = vpop.f32.mrf.mxu0
    %427 = vdwg.mxu0
    %428 = vmax.xlane.f32.xlu0 %v425
    %v429 = vpop.xlane.xlu0 %428
    %v430 = vsub.f32 %v425, %v429
    %v431 = vmul.f32 %v430, 1.442695
    %v432 = vpow.pop %v431
    %433 = vadd.xlane.f32.xlu0 %v432
    %v434 = vpop.xlane.xlu0 %433
    %v435 = vrcp.pop %v434
    %v436 = vmul.f32 %v434, %v435
    %v437 = vsub.f32 2.0, %v436
    %v438 = vmul.f32 %v435, %v437
    %v439 = vmul.f32 %v432, %v438
    %440 = vst [vmem:[#allocation8] sm:$0xff] %v439
    // Predicated region
    $region34: #{tpu_custom_call.1} parent=1 // pred_check
      _
    $region35: #{tpu_custom_call.1} parent=1 // pred_check_branch
      %442 = sbr.rel (0) target = $region37
    $region36: #{tpu_custom_call.1} parent=1 // pred_region
      %444 = vsyncadd [#allocation5], 0
      %s446 = sshll.u32 [#allocation8], 4
      %s447 = int_to_ptr.vmem [resolvable:$true] %s446
      %s448 = sshll.u32 %s6, 4
      %s449 = int_to_ptr.hbm [resolvable:$true] %s448
      %451 = dma.vmem_to_hbm [thread:$0]  %s447, 128, %s449, [#allocation5]
    $region37: #{tpu_custom_call.1} parent=1 // pred_fallthru
      _
    // Predicated region
    $region38: #{tpu_custom_call.1} parent=1 // pred_check
      _
    $region39: #{tpu_custom_call.1} parent=1 // pred_check_branch
      %453 = sbr.rel (0) target = $region41
    $region40: #{tpu_custom_call.1} parent=1 // pred_region
      %455 = dma.done [#allocation5], 128
    $region41: #{tpu_custom_call.1} parent=1 // pred_fallthru
      _
    %456 = vsyncpa [#allocation4], 1
    %457 = vsyncpa [#allocation7], 1
    %458 = vsyncpa [#allocation5], 1

</llo_original>
